<compile_context>
chip_gen: v6e
topology: v6e:2x2x1
jax: 0.10.0
libtpu: 0.0.40
codegen_flags: <defaults>
</compile_context>

<pallas_src>
import jax
import jax.numpy as jnp
from jax.experimental import pallas as pl
from jax.experimental.pallas import tpu as pltpu


# ----------------------------------------------------------------------------
# Kernels
# ----------------------------------------------------------------------------
def ffn_kernel_resident(x_ref, w1_ref, b1_ref, w2_ref, b2_ref, o_ref):
    """Weights-resident path (hidden axis not tiled): no scratch needed."""
    h = jnp.dot(x_ref[...], w1_ref[...], preferred_element_type=jnp.float32)
    h = jnp.maximum(h + b1_ref[...].astype(jnp.float32), 0.0)        # bias+ReLU
    out = jnp.dot(h.astype(w2_ref.dtype), w2_ref[...],
                  preferred_element_type=jnp.float32)
    o_ref[...] = (out + b2_ref[...].astype(jnp.float32)).astype(o_ref.dtype)


def ffn_kernel_tiled(x_ref, w1_ref, b1_ref, w2_ref, b2_ref, o_ref, acc_ref):
    """Hidden-tiled path: f32 accumulator resident across the k grid axis."""
    k = pl.program_id(1)

    h = jnp.dot(x_ref[...], w1_ref[...], preferred_element_type=jnp.float32)
    h = jnp.maximum(h + b1_ref[...].astype(jnp.float32), 0.0)        # bias+ReLU
    partial = jnp.dot(h.astype(w2_ref.dtype), w2_ref[...],
                      preferred_element_type=jnp.float32)

    @pl.when(k == 0)
    def _init():                       # write directly, skip zero-init + add
        acc_ref[...] = partial

    @pl.when(k > 0)
    def _accum():
        acc_ref[...] += partial

    @pl.when(k == pl.num_programs(1) - 1)
    def _finish():                     # add b2 exactly once, downcast on store
        o_ref[...] = (acc_ref[...]
                      + b2_ref[...].astype(jnp.float32)).astype(o_ref.dtype)


# ----------------------------------------------------------------------------
# Tile selection (explicit per-generation VMEM budget)
# ----------------------------------------------------------------------------
def _vmem_budget_bytes():
    cap = 64 << 20                      # conservative default (v7x per-TC VMEM)
    try:
        info = pltpu.get_tpu_info()
        cap = int(getattr(info, "vmem_capacity_bytes", cap)) or cap
    except Exception:
        pass
    # ~80% of physical: ~102 MiB on v5e/v6e (128 MiB), ~51 MiB on v7x (64 MiB).
    return (cap * 4) // 5


def _sublane(itemsize):
    # dtype sublane packing multiple: f32 -> 8, bf16 -> 16, int8/fp8 -> 32
    return {4: 8, 2: 16, 1: 32}.get(int(itemsize), 8)


def _weights_resident_bytes(d_model, th, n_k, w_bytes):
    # Weight slices are double-buffered when the hidden axis is tiled, single
    # copy (constant index map) on the resident path.  Biases are tiny.
    w_copies = 2 if n_k == 1 else 4
    return w_copies * d_model * th * w_bytes + 4 * (th + d_model) * w_bytes


def _row_bytes(d_model, n_k, x_bytes, o_bytes):
    # Per M-row VMEM cost: double-buffered x and out tiles, plus the f32
    # accumulator when the hidden axis is tiled.
    acc = 4 if n_k > 1 else 0
    return d_model * (acc + 2 * x_bytes + 2 * o_bytes)


def _pick_th(d_model, d_hidden, w_bytes, budget):
    # Fast path: both full weight matrices resident -> fetched from HBM once.
    if 2 * d_model * d_hidden * w_bytes <= budget // 3:
        return d_hidden
    # Otherwise tile the hidden axis.  th=256 matches the 256-wide MXU and
    # keeps the weight-slice residency small so VMEM goes to tm instead.
    for cand in (256, 128):
        if d_hidden % cand == 0:
            return cand
    # TODO(synk): pad d_hidden to a 128-multiple for odd hidden sizes instead
    # of keeping the whole (possibly large) weight slice resident.
    return d_hidden


def _pick_tm(M, d_model, th, n_k, x_bytes, w_bytes, o_bytes, budget):
    sub = _sublane(x_bytes)
    left = budget - _weights_resident_bytes(d_model, th, n_k, w_bytes)
    tm_cap = max(sub, left // _row_bytes(d_model, n_k, x_bytes, o_bytes))

    # 512-1024 rows crosses the MXU roofline on all generations; the budget
    # naturally pulls this down on v7x (64 MiB VMEM).
    tm = min(M, tm_cap, 1024)
    if tm >= M:
        return M                        # single M tile (block == full dim: legal)
    if tm >= 256:
        return (tm // 256) * 256        # MXU / lane friendly row count
    return max(sub, (tm // sub) * sub)  # at least the dtype sublane multiple


# ----------------------------------------------------------------------------
# Wrapper
# ----------------------------------------------------------------------------
def feed_forward(x, w1, b1, w2, b2, *, tm=None, th=None):
    """Fused Linear -> ReLU -> Linear.  x: (..., d_model) -> same shape/dtype.
    Weights are stored pre-transposed to [in_features, out_features]."""
    d_model, d_hidden = w1.shape
    orig_shape = x.shape
    out_dtype = x.dtype

    # Cast activations to the weight dtype in the wrapper (halves the x-tile
    # DMA when weights are bf16) instead of inside the kernel.
    x2d = x.reshape(-1, d_model).astype(w1.dtype)
    M = x2d.shape[0]

    x_bytes = x2d.dtype.itemsize
    w_bytes = w1.dtype.itemsize
    o_bytes = jnp.dtype(out_dtype).itemsize

    budget = _vmem_budget_bytes()

    if th is None or th <= 0 or d_hidden % th != 0:
        th = _pick_th(d_model, d_hidden, w_bytes, budget)
    n_k = d_hidden // th

    if tm is None:
        tm = _pick_tm(M, d_model, th, n_k, x_bytes, w_bytes, o_bytes, budget)
    tm = min(tm, M)
    n_m = pl.cdiv(M, tm)

    b1_2d = b1.reshape(1, d_hidden)
    b2_2d = b2.reshape(1, d_model)

    # Truthful HBM traffic: weights are re-streamed once per M tile when the
    # hidden axis is tiled, fetched exactly once on the resident path.  The
    # intermediate h never touches HBM.
    weight_stream = (1 if n_k == 1 else n_m) * (
        (w1.size + w2.size + b1.size + b2.size) * w_bytes)
    bytes_accessed = x2d.size * x_bytes + weight_stream + M * d_model * o_bytes
    cost = pl.CostEstimate(flops=4 * M * d_model * d_hidden,      # two GEMMs
                           transcendentals=0,
                           bytes_accessed=int(bytes_accessed))

    # Explicit VMEM limit: residency estimate + margin, clamped to the budget
    # (avoids the 16/32 MiB scoped defaults biting at realistic shapes).
    vmem_needed = (_weights_resident_bytes(d_model, th, n_k, w_bytes)
                   + tm * _row_bytes(d_model, n_k, x_bytes, o_bytes))
    vmem_limit = int(min(budget, max(vmem_needed + (4 << 20), 32 << 20)))

    if n_k == 1:
        grid_spec = pltpu.PrefetchScalarGridSpec(
            num_scalar_prefetch=0,
            grid=(n_m,),
            in_specs=[
                pl.BlockSpec((tm, d_model), lambda i: (i, 0)),        # x tile
                pl.BlockSpec((d_model, d_hidden), lambda i: (0, 0)),  # W1 resident
                pl.BlockSpec((1, d_hidden), lambda i: (0, 0)),        # b1 resident
                pl.BlockSpec((d_hidden, d_model), lambda i: (0, 0)),  # W2 resident
                pl.BlockSpec((1, d_model), lambda i: (0, 0)),         # b2 resident
            ],
            out_specs=pl.BlockSpec((tm, d_model), lambda i: (i, 0)),
        )
        kernel = ffn_kernel_resident
        dim_sem = ("parallel",)
    else:
        grid_spec = pltpu.PrefetchScalarGridSpec(
            num_scalar_prefetch=0,
            grid=(n_m, n_k),                                   # reduction axis last
            in_specs=[
                pl.BlockSpec((tm, d_model), lambda i, k: (i, 0)),   # x tile
                pl.BlockSpec((d_model, th), lambda i, k: (0, k)),   # W1 hidden slice
                pl.BlockSpec((1, th), lambda i, k: (0, k)),         # b1 hidden slice
                pl.BlockSpec((th, d_model), lambda i, k: (k, 0)),   # W2 hidden slice
                pl.BlockSpec((1, d_model), lambda i, k: (0, 0)),    # b2 (constant)
            ],
            out_specs=pl.BlockSpec((tm, d_model), lambda i, k: (i, 0)),
            scratch_shapes=[pltpu.VMEM((tm, d_model), jnp.float32)],
        )
        kernel = ffn_kernel_tiled
        dim_sem = ("parallel", "arbitrary")

    out = pl.pallas_call(
        kernel,
        out_shape=jax.ShapeDtypeStruct((M, d_model), out_dtype),
        grid_spec=grid_spec,
        compiler_params=pltpu.CompilerParams(
            dimension_semantics=dim_sem,
            vmem_limit_bytes=vmem_limit),
        cost_estimate=cost,
    )(x2d, w1, b1_2d, w2, b2_2d)

    return out.reshape(orig_shape)


def init_params(key, d_model, d_hidden, dtype=jnp.float32):
    """Deterministic init matching torch.nn.Linear (uniform +/- 1/sqrt(fan_in)).
    Weights are stored already transposed to [in, out]."""
    k1, k2, k3, k4 = jax.random.split(key, 4)
    bound1 = 1.0 / (d_model ** 0.5)
    bound2 = 1.0 / (d_hidden ** 0.5)
    w1 = jax.random.uniform(k1, (d_model, d_hidden), dtype, -bound1, bound1)
    b1 = jax.random.uniform(k2, (d_hidden,), dtype, -bound1, bound1)
    w2 = jax.random.uniform(k3, (d_hidden, d_model), dtype, -bound2, bound2)
    b2 = jax.random.uniform(k4, (d_model,), dtype, -bound2, bound2)
    return w1, b1, w2, b2


if __name__ == "__main__":
    # Lane-dense small shapes; d_hidden matches the module's default (512).
    batch, seq, d_model, d_hidden = 2, 8, 128, 512

    key = jax.random.PRNGKey(0)
    kx, kp = jax.random.split(key)
    x = jax.random.normal(kx, (batch, seq, d_model), dtype=jnp.float32)
    w1, b1, w2, b2 = init_params(kp, d_model, d_hidden, dtype=jnp.float32)

    # f32 path; th=128 forces the hidden-tiled kernel (accumulator + epilogue).
    out = feed_forward(x, w1, b1, w2, b2, th=128)
    out = jax.block_until_ready(out)
    ref = jnp.maximum(x @ w1 + b1, 0.0) @ w2 + b2
    assert out.shape == x.shape
    assert jnp.allclose(out, ref, atol=2e-3, rtol=2e-3), (
        float(jnp.max(jnp.abs(out - ref))))

    # bf16 weights: auto tile selection takes the weights-resident fast path
    # (single hidden block, weights fetched once); f32 accumulation, f32 output.
    w1b, b1b, w2b, b2b = (a.astype(jnp.bfloat16) for a in (w1, b1, w2, b2))
    out_bf16 = jax.block_until_ready(feed_forward(x, w1b, b1b, w2b, b2b))
    hb = jnp.maximum(
        jnp.dot(x.astype(jnp.bfloat16), w1b, preferred_element_type=jnp.float32)
        + b1b.astype(jnp.float32), 0.0)
    ref_bf16 = (jnp.dot(hb.astype(jnp.bfloat16), w2b,
                        preferred_element_type=jnp.float32)
                + b2b.astype(jnp.float32)).astype(x.dtype)
    assert out_bf16.shape == x.shape
    assert jnp.allclose(out_bf16, ref_bf16, atol=5e-3, rtol=5e-3), (
        float(jnp.max(jnp.abs(out_bf16 - ref_bf16))))

    print("KERNEL_OK")
</pallas_src>

<mosaic_0001>
module attributes {stable_mosaic.version = 11 : i64} {
  func.func @ffn_kernel_tiled(%arg0: i32, %arg1: i32, %arg2: memref<16x128xf32, #tpu.memory_space<vmem>>, %arg3: memref<128x128xf32, #tpu.memory_space<vmem>>, %arg4: memref<1x128xf32, #tpu.memory_space<vmem>>, %arg5: memref<128x128xf32, #tpu.memory_space<vmem>>, %arg6: memref<1x128xf32, #tpu.memory_space<vmem>>, %arg7: memref<16x128xf32, #tpu.memory_space<vmem>>, %arg8: memref<16x128xf32, #tpu.memory_space<vmem>>) attributes {dimension_semantics = [#tpu.dimension_semantics<parallel>, #tpu.dimension_semantics<arbitrary>], iteration_bounds = array<i64: 1, 4>, scalar_prefetch = 0 : i64, scratch_operands = 1 : i64, tpu.core_type = #tpu.core_type<tc>, window_params = [{transform_indices = @transform_0, window_bounds = array<i64: 16, 128>}, {transform_indices = @transform_1, window_bounds = array<i64: 128, 128>}, {transform_indices = @transform_2, window_bounds = array<i64: 1, 128>}, {transform_indices = @transform_3, window_bounds = array<i64: 128, 128>}, {pipeline_mode = #tpu.pipeline_mode<synchronous>, transform_indices = @transform_4, window_bounds = array<i64: 1, 128>}, {transform_indices = @transform_5, window_bounds = array<i64: 16, 128>}]} {
    %c0 = arith.constant 0 : index
    %c0_0 = arith.constant 0 : index
    %0 = vector.load %arg2[%c0, %c0_0] : memref<16x128xf32, #tpu.memory_space<vmem>>, vector<16x128xf32>
    %c0_1 = arith.constant 0 : index
    %c0_2 = arith.constant 0 : index
    %1 = vector.load %arg3[%c0_1, %c0_2] : memref<128x128xf32, #tpu.memory_space<vmem>>, vector<128x128xf32>
    %cst = arith.constant dense<0.000000e+00> : vector<16x128xf32>
    %2 = tpu.matmul %0, %1, %cst {dimension_numbers = #tpu.dot_dimension_numbers<[1], [0], [0], [1], [0, 0, 1, 1], [], []>} : vector<16x128xf32>, vector<128x128xf32>, vector<16x128xf32> -> vector<16x128xf32>
    %c0_3 = arith.constant 0 : index
    %c0_4 = arith.constant 0 : index
    %3 = vector.load %arg4[%c0_3, %c0_4] : memref<1x128xf32, #tpu.memory_space<vmem>>, vector<1x128xf32>
    %4 = vector.broadcast %3 : vector<1x128xf32> to vector<16x128xf32>
    %5 = arith.addf %2, %4 : vector<16x128xf32>
    %cst_5 = arith.constant 0.000000e+00 : f32
    %6 = vector.broadcast %cst_5 : f32 to vector<16x128xf32>
    %7 = arith.maximumf %5, %6 : vector<16x128xf32>
    %c0_6 = arith.constant 0 : index
    %c0_7 = arith.constant 0 : index
    %8 = vector.load %arg5[%c0_6, %c0_7] : memref<128x128xf32, #tpu.memory_space<vmem>>, vector<128x128xf32>
    %cst_8 = arith.constant dense<0.000000e+00> : vector<16x128xf32>
    %9 = tpu.matmul %7, %8, %cst_8 {dimension_numbers = #tpu.dot_dimension_numbers<[1], [0], [0], [1], [0, 0, 1, 1], [], []>} : vector<16x128xf32>, vector<128x128xf32>, vector<16x128xf32> -> vector<16x128xf32>
    %c0_i32 = arith.constant 0 : i32
    %10 = arith.cmpi eq, %arg1, %c0_i32 : i32
    %11 = arith.extui %10 : i1 to i32
    %c0_i32_9 = arith.constant 0 : i32
    %12 = arith.cmpi ne, %11, %c0_i32_9 : i32
    scf.if %12 {
      %c0_13 = arith.constant 0 : index
      %c0_14 = arith.constant 0 : index
      %19 = vector.load %arg8[%c0_13, %c0_14] : memref<16x128xf32, #tpu.memory_space<vmem>>, vector<16x128xf32>
      tpu.vector_store %arg8[%c0_13, %c0_14], %9 {strides = array<i32>} : memref<16x128xf32, #tpu.memory_space<vmem>>, vector<16x128xf32>,
    } else {
    }
    %c0_i32_10 = arith.constant 0 : i32
    %13 = arith.cmpi sgt, %arg1, %c0_i32_10 : i32
    %14 = arith.extui %13 : i1 to i32
    %c0_i32_11 = arith.constant 0 : i32
    %15 = arith.cmpi ne, %14, %c0_i32_11 : i32
    scf.if %15 {
      %c0_13 = arith.constant 0 : index
      %c0_14 = arith.constant 0 : index
      %19 = vector.load %arg8[%c0_13, %c0_14] : memref<16x128xf32, #tpu.memory_space<vmem>>, vector<16x128xf32>
      %20 = arith.addf %19, %9 : vector<16x128xf32>
      %c0_15 = arith.constant 0 : index
      %c0_16 = arith.constant 0 : index
      %21 = vector.load %arg8[%c0_15, %c0_16] : memref<16x128xf32, #tpu.memory_space<vmem>>, vector<16x128xf32>
      tpu.vector_store %arg8[%c0_15, %c0_16], %20 {strides = array<i32>} : memref<16x128xf32, #tpu.memory_space<vmem>>, vector<16x128xf32>,
    } else {
    }
    %c3_i32 = arith.constant 3 : i32
    %16 = arith.cmpi eq, %arg1, %c3_i32 : i32
    %17 = arith.extui %16 : i1 to i32
    %c0_i32_12 = arith.constant 0 : i32
    %18 = arith.cmpi ne, %17, %c0_i32_12 : i32
    scf.if %18 {
      %c0_13 = arith.constant 0 : index
      %c0_14 = arith.constant 0 : index
      %19 = vector.load %arg8[%c0_13, %c0_14] : memref<16x128xf32, #tpu.memory_space<vmem>>, vector<16x128xf32>
      %c0_15 = arith.constant 0 : index
      %c0_16 = arith.constant 0 : index
      %20 = vector.load %arg6[%c0_15, %c0_16] : memref<1x128xf32, #tpu.memory_space<vmem>>, vector<1x128xf32>
      %21 = vector.broadcast %20 : vector<1x128xf32> to vector<16x128xf32>
      %22 = arith.addf %19, %21 : vector<16x128xf32>
      %c0_17 = arith.constant 0 : index
      %c0_18 = arith.constant 0 : index
      %23 = vector.load %arg7[%c0_17, %c0_18] : memref<16x128xf32, #tpu.memory_space<vmem>>, vector<16x128xf32>
      tpu.vector_store %arg7[%c0_17, %c0_18], %22 {strides = array<i32>} : memref<16x128xf32, #tpu.memory_space<vmem>>, vector<16x128xf32>,
    } else {
    }
    return
  }
  func.func @transform_0(%arg0: i32, %arg1: i32) -> (i32, i32) {
    %c0_i32 = arith.constant 0 : i32
    %c0_i32_0 = arith.constant 0 : i32
    return %arg0, %c0_i32 : i32, i32
  }
  func.func @transform_1(%arg0: i32, %arg1: i32) -> (i32, i32) {
    %c0_i32 = arith.constant 0 : i32
    %c0_i32_0 = arith.constant 0 : i32
    return %c0_i32, %arg1 : i32, i32
  }
  func.func @transform_2(%arg0: i32, %arg1: i32) -> (i32, i32) {
    %c0_i32 = arith.constant 0 : i32
    %c0_i32_0 = arith.constant 0 : i32
    return %c0_i32, %arg1 : i32, i32
  }
  func.func @transform_3(%arg0: i32, %arg1: i32) -> (i32, i32) {
    %c0_i32 = arith.constant 0 : i32
    %c0_i32_0 = arith.constant 0 : i32
    return %arg1, %c0_i32 : i32, i32
  }
  func.func @transform_4(%arg0: i32, %arg1: i32) -> (i32, i32) {
    %c0_i32 = arith.constant 0 : i32
    %c0_i32_0 = arith.constant 0 : i32
    %c0_i32_1 = arith.constant 0 : i32
    return %c0_i32, %c0_i32_0 : i32, i32
  }
  func.func @transform_5(%arg0: i32, %arg1: i32) -> (i32, i32) {
    %c0_i32 = arith.constant 0 : i32
    %c0_i32_0 = arith.constant 0 : i32
    return %arg0, %c0_i32 : i32, i32
  }
}

</mosaic_0001>

<llo_original>
// kernel: tpu_custom_call.1
$region0: #{tpu_custom_call.1}
  #allocation0 [shape = 'u32[]', space=smem, size = 0x4, offset = 0x4, fixed_abs, tag = 'smem constant byte address 0x4 - core index']
  #allocation1 [shape = 'u32[144,128]{1,0:T(1,128)}', space=vmem, size = 0x12000, scoped, tag = 'internal scratch']
  #allocation2 [shape = 'f32[16,128]{1,0:T(8,128)}', space=vmem, size = 0x2000, scoped, tag = 'scratch operand']
  %s0 = inlined_call_operand.hbm [shape: f32[16,128], index: 0, kind: input, shape index: {}]
  %s1 = inlined_call_operand.hbm [shape: f32[128,512], index: 1, kind: input, shape index: {}]
  %s2 = inlined_call_operand.hbm [shape: f32[1,512], index: 2, kind: input, shape index: {}]
  %s3 = inlined_call_operand.hbm [shape: f32[512,128], index: 3, kind: input, shape index: {}]
  %s4 = inlined_call_operand.vmem [shape: f32[1,128], index: 4, kind: input, shape index: {}]
  %s5 = inlined_call_operand.hbm [shape: f32[16,128], index: 5, kind: output, shape index: {}]
  %s6 = sld [smem:[#allocation0]]
  $region81: #{tpu_custom_call.1} parent=0
    _
  %s8 = ssub.s32 1, %s6
  %s9 = scalar_select 0, %s8, %s6
  $region1: #{tpu_custom_call.1} parent=0
    #allocation3 [shape = 'u8[8192]{0}', space=vmem, size = 0x2000, scoped, tag = 'input window, operand 0, single buffered']
    #allocation4 [shape = 's32[2]{0}', space=sflag, size = 0x8, scoped, tag = 'scoped memory for tpu_custom_call.1']
    #allocation5 [shape = 's32[2]{0}', space=sflag, size = 0x8, scoped, tag = 'scoped memory for tpu_custom_call.1']
    #allocation6 [shape = 'u8[131072]{0}', space=vmem, size = 0x20000, scoped, tag = 'input window, operand 1']
    #allocation7 [shape = 's32[2]{0}', space=sflag, size = 0x8, scoped, tag = 'scoped memory for tpu_custom_call.1']
    #allocation8 [shape = 'u8[1024]{0}', space=vmem, size = 0x400, scoped, tag = 'input window, operand 2']
    #allocation9 [shape = 'u8[131072]{0}', space=vmem, size = 0x20000, scoped, tag = 'input window, operand 3']
    #allocation10 [shape = 's32[2]{0}', space=sflag, size = 0x8, scoped, tag = 'scoped memory for tpu_custom_call.1']
    #allocation11 [shape = 'u8[8192]{0}', space=vmem, size = 0x2000, scoped, tag = 'output window, operand 0, single buffered']
    %10 = vsyncpa [#allocation4], 0
    %11 = vsyncpa [#allocation7], 0
    %s12 = scalar_lea.sflag [#allocation7], 1
    %13 = vsyncpa %s12, 0
    %14 = vsyncpa [#allocation10], 0
    %s15 = scalar_lea.sflag [#allocation10], 1
    %16 = vsyncpa %s15, 0
    %17 = vsyncpa [#allocation5], 0
    loop: start=0, step=1, limit=6
    $region2: #{tpu_custom_call.1} parent=1 // loop_pre_header
      _
    $region3: #{tpu_custom_call.1} parent=1 // loop_header
      %s19 = sphi 0, %s23
      %p20 = scmp.ge.s32.totalorder %s19, 6
      %s26 = sphi 0, %s38
      %s27 = sphi 0, %s34
      %s28 = sphi 0, %s26
      %s29 = sphi 0, %s27
      %s30 = sphi 0, %s28
      %s31 = sphi 0, %s29
      %s41 = sphi 0, %s43
      %s44 = sphi 0, %s41
      %s45 = sphi 0, %s44
      %s61 = sphi 0, %s45
      %s67 = sphi 0, %s69
      %s70 = sphi 0, %s67
      %s71 = sphi 0, %s70
      %s87 = sphi 0, %s71
      %s93 = sphi 0, %s95
      %s96 = sphi 0, %s93
      %s97 = sphi 0, %s96
      %s113 = sphi 0, %s97
      %s119 = sphi 0, %s121
      %s122 = sphi 0, %s119
      %s123 = sphi 0, %s122
      %s139 = sphi 0, %s123
      %s143 = sphi 0, %s143
      %s145 = sphi 0, %s143
      %s146 = sphi 0, %s145
      %s160 = sphi 0, %s146
      %s166 = sphi 0, %s168
      %s169 = sphi 0, %s166
      %s170 = sphi 0, %s169
      %s186 = sphi 0, %s170
    $region4: #{tpu_custom_call.1} parent=1 // loop_header_branch
      %22 = sbr.rel (%p20) target = $region8
    $region5: #{tpu_custom_call.1} parent=1 // loop_body
      %s24 = ssub.s32 %s19, 1
      %s25 = ssub.s32 %s19, 2
      %s32 = sadd.s32 1, %s27
      %p33 = scmp.ge.s32.totalorder %s32, 4
      %s34 = scalar_select %p33, 0, %s32
      %s35 = sadd.s32 1, %s26
      %s36 = scalar_select %p33, %s35, %s26
      %p37 = scmp.ge.s32.totalorder %s36, 1
      %s38 = scalar_select %p37, 0, %s36
      %s39 = ssub.s32 %s26, %s38
      %p40 = scmp.eq.s32.totalorder %s39, 0
      %s42 = sadd.s32 %s41, 1
      %s43 = scalar_select %p40, %s41, %s42
      %p46 = pneg %p40
      %p47 = scmp.eq.s32.totalorder %s19, 3
      %p48 = por %p46, %p47
      %p49 = scmp.ne.s32.totalorder %s41, %s44
      %p50 = scmp.eq.s32.totalorder %s19, 0
      %p51 = por %p49, %p50
      %p52 = scmp.ne.s32.totalorder %s41, %s44
      %p53 = scmp.eq.s32.totalorder %s24, 3
      %p54 = por %p52, %p53
      %p55 = scmp.ne.s32.totalorder %s44, %s45
      %p56 = scmp.eq.s32.totalorder %s24, 0
      %p57 = por %p55, %p56
      %p58 = scmp.ne.s32.totalorder %s44, %s45
      %p59 = scmp.eq.s32.totalorder %s25, 3
      %p60 = por %p58, %p59
      %p62 = scmp.ne.s32.totalorder %s45, %s61
      %p63 = scmp.eq.s32.totalorder %s25, 0
      %p64 = por %p62, %p63
      %s65 = ssub.s32 %s27, %s34
      %p66 = scmp.eq.s32.totalorder %s65, 0
      %s68 = sadd.s32 %s67, 1
      %s69 = scalar_select %p66, %s67, %s68
      %p72 = pneg %p66
      %p73 = scmp.eq.s32.totalorder %s19, 3
      %p74 = por %p72, %p73
      %p75 = scmp.ne.s32.totalorder %s67, %s70
      %p76 = scmp.eq.s32.totalorder %s19, 0
      %p77 = por %p75, %p76
      %p78 = scmp.ne.s32.totalorder %s67, %s70
      %p79 = scmp.eq.s32.totalorder %s24, 3
      %p80 = por %p78, %p79
      %p81 = scmp.ne.s32.totalorder %s70, %s71
      %p82 = scmp.eq.s32.totalorder %s24, 0
      %p83 = por %p81, %p82
      %p84 = scmp.ne.s32.totalorder %s70, %s71
      %p85 = scmp.eq.s32.totalorder %s25, 3
      %p86 = por %p84, %p85
      %p88 = scmp.ne.s32.totalorder %s71, %s87
      %p89 = scmp.eq.s32.totalorder %s25, 0
      %p90 = por %p88, %p89
      %s91 = ssub.s32 %s27, %s34
      %p92 = scmp.eq.s32.totalorder %s91, 0
      %s94 = sadd.s32 %s93, 1
      %s95 = scalar_select %p92, %s93, %s94
      %p98 = pneg %p92
      %p99 = scmp.eq.s32.totalorder %s19, 3
      %p100 = por %p98, %p99
      %p101 = scmp.ne.s32.totalorder %s93, %s96
      %p102 = scmp.eq.s32.totalorder %s19, 0
      %p103 = por %p101, %p102
      %p104 = scmp.ne.s32.totalorder %s93, %s96
      %p105 = scmp.eq.s32.totalorder %s24, 3
      %p106 = por %p104, %p105
      %p107 = scmp.ne.s32.totalorder %s96, %s97
      %p108 = scmp.eq.s32.totalorder %s24, 0
      %p109 = por %p107, %p108
      %p110 = scmp.ne.s32.totalorder %s96, %s97
      %p111 = scmp.eq.s32.totalorder %s25, 3
      %p112 = por %p110, %p111
      %p114 = scmp.ne.s32.totalorder %s97, %s113
      %p115 = scmp.eq.s32.totalorder %s25, 0
      %p116 = por %p114, %p115
      %s117 = ssub.s32 %s27, %s34
      %p118 = scmp.eq.s32.totalorder %s117, 0
      %s120 = sadd.s32 %s119, 1
      %s121 = scalar_select %p118, %s119, %s120
      %p124 = pneg %p118
      %p125 = scmp.eq.s32.totalorder %s19, 3
      %p126 = por %p124, %p125
      %p127 = scmp.ne.s32.totalorder %s119, %s122
      %p128 = scmp.eq.s32.totalorder %s19, 0
      %p129 = por %p127, %p128
      %p130 = scmp.ne.s32.totalorder %s119, %s122
      %p131 = scmp.eq.s32.totalorder %s24, 3
      %p132 = por %p130, %p131
      %p133 = scmp.ne.s32.totalorder %s122, %s123
      %p134 = scmp.eq.s32.totalorder %s24, 0
      %p135 = por %p133, %p134
      %p136 = scmp.ne.s32.totalorder %s122, %s123
      %p137 = scmp.eq.s32.totalorder %s25, 3
      %p138 = por %p136, %p137
      %p140 = scmp.ne.s32.totalorder %s123, %s139
      %p141 = scmp.eq.s32.totalorder %s25, 0
      %p142 = por %p140, %p141
      %s144 = sadd.s32 %s143, 1
      %p147 = scmp.eq.s32.totalorder %s19, 3
      %p148 = scmp.ne.s32.totalorder %s143, %s145
      %p149 = scmp.eq.s32.totalorder %s19, 0
      %p150 = por %p148, %p149
      %p151 = scmp.ne.s32.totalorder %s143, %s145
      %p152 = scmp.eq.s32.totalorder %s24, 3
      %p153 = por %p151, %p152
      %p154 = scmp.ne.s32.totalorder %s145, %s146
      %p155 = scmp.eq.s32.totalorder %s24, 0
      %p156 = por %p154, %p155
      %p157 = scmp.ne.s32.totalorder %s145, %s146
      %p158 = scmp.eq.s32.totalorder %s25, 3
      %p159 = por %p157, %p158
      %p161 = scmp.ne.s32.totalorder %s146, %s160
      %p162 = scmp.eq.s32.totalorder %s25, 0
      %p163 = por %p161, %p162
      %s164 = ssub.s32 %s26, %s38
      %p165 = scmp.eq.s32.totalorder %s164, 0
      %s167 = sadd.s32 %s166, 1
      %s168 = scalar_select %p165, %s166, %s167
      %p171 = pneg %p165
      %p172 = scmp.eq.s32.totalorder %s19, 3
      %p173 = por %p171, %p172
      %p174 = scmp.ne.s32.totalorder %s166, %s169
      %p175 = scmp.eq.s32.totalorder %s19, 0
      %p176 = por %p174, %p175
      %p177 = scmp.ne.s32.totalorder %s166, %s169
      %p178 = scmp.eq.s32.totalorder %s24, 3
      %p179 = por %p177, %p178
      %p180 = scmp.ne.s32.totalorder %s169, %s170
      %p181 = scmp.eq.s32.totalorder %s24, 0
      %p182 = por %p180, %p181
      %p183 = scmp.ne.s32.totalorder %s169, %s170
      %p184 = scmp.eq.s32.totalorder %s25, 3
      %p185 = por %p183, %p184
      %p187 = scmp.ne.s32.totalorder %s170, %s186
      %p188 = scmp.eq.s32.totalorder %s25, 0
      %p189 = por %p187, %p188
      %p190 = scmp.le.s32.totalorder 1, %s19
      %p191 = scmp.lt.s32.totalorder %s19, 5
      %p192 = pnand %p190, %p191
      %p193 = pneg %p192
      // Predicated region
      $region9: #{tpu_custom_call.1} parent=5 // pred_check
        _
      $region10: #{tpu_custom_call.1} parent=5 // pred_check_branch
        %195 = sbr.rel (%p192) target = $region12
      $region11: #{tpu_custom_call.1} parent=5 // pred_region
        %s196 = ssub.s32 %s19, 1
        // Predicated region
        $region13: #{tpu_custom_call.1} parent=11 // pred_check
          %p197 = pneg %p57
        $region14: #{tpu_custom_call.1} parent=11 // pred_check_branch
          %199 = sbr.rel (%p197) target = $region16
        $region15: #{tpu_custom_call.1} parent=11 // pred_region
          %s200 = smul.u32 2, %s28
          %s202 = ssub.s32 256, 256
          %203 = vsyncadd [#allocation4], %s202
          %s204 = smul.addr %s200, 128
          %s205 = scalar_lea.hbm %s0, %s204
          %s206 = sshll.u32 [#allocation3], 4
          %s207 = int_to_ptr.vmem [resolvable:$true] %s206
          %212 = dma.hbm_to_vmem [thread:$0]  %s205, 256, %s207, [#allocation4], 128, 128, 8
        $region16: #{tpu_custom_call.1} parent=11 // pred_fallthru
          _
        // Predicated region
        $region17: #{tpu_custom_call.1} parent=11 // pred_check
          %p213 = pneg %p156
        $region18: #{tpu_custom_call.1} parent=11 // pred_check_branch
          %215 = sbr.rel (%p213) target = $region20
        $region19: #{tpu_custom_call.1} parent=11 // pred_region
          _
        $region20: #{tpu_custom_call.1} parent=11 // pred_fallthru
          _
      $region12: #{tpu_custom_call.1} parent=5 // pred_fallthru
        _
      %p216 = scmp.lt.s32.totalorder %s19, 4
      // Predicated region
      $region21: #{tpu_custom_call.1} parent=5 // pred_check
        %p217 = pneg %p216
      $region22: #{tpu_custom_call.1} parent=5 // pred_check_branch
        %219 = sbr.rel (%p217) target = $region24
      $region23: #{tpu_custom_call.1} parent=5 // pred_region
        // Predicated region
        $region25: #{tpu_custom_call.1} parent=23 // pred_check
          %p220 = pneg %p77
        $region26: #{tpu_custom_call.1} parent=23 // pred_check_branch
          %222 = sbr.rel (%p220) target = $region28
        $region27: #{tpu_custom_call.1} parent=23 // pred_region
          %s223 = sand.u32 %s19, 1
          %s224 = scalar_lea.sflag [#allocation7], %s223
          %s225 = sand.u32 %s67, 1
          %s226 = smul.addr %s225, 128
          %s227 = scalar_lea.vmem [#allocation6], %s226
          %s229 = ssub.s32 2048, 2048
          %230 = vsyncadd %s224, %s229
          %s231 = smul.addr %s27, 128
          %s232 = scalar_lea.hbm %s1, %s231
          %s233 = sshll.u32 %s227, 4
          %s234 = int_to_ptr.vmem [resolvable:$true] %s233
          %239 = dma.hbm_to_vmem [thread:$0]  %s232, 2048, %s234, %s224, 512, 128, 8
        $region28: #{tpu_custom_call.1} parent=23 // pred_fallthru
          _
        // Predicated region
        $region29: #{tpu_custom_call.1} parent=23 // pred_check
          %p240 = pneg %p103
        $region30: #{tpu_custom_call.1} parent=23 // pred_check_branch
          %242 = sbr.rel (%p240) target = $region32
        $region31: #{tpu_custom_call.1} parent=23 // pred_region
          %s243 = sand.u32 %s19, 1
          %s244 = scalar_lea.sflag [#allocation7], %s243
          %s245 = sand.u32 %s93, 1
          %s246 = scalar_lea.vmem [#allocation8], %s245
          %s248 = ssub.s32 16, 16
          %249 = vsyncadd %s244, %s248
          %s250 = smul.addr %s27, 16
          %s251 = scalar_lea.hbm %s2, %s250
          %s253 = sshll.u32 %s246, 4
          %s254 = int_to_ptr.vmem [resolvable:$true] %s253
          %256 = dma.hbm_to_vmem [thread:$0]  %s251, 16, %s254, %s244
        $region32: #{tpu_custom_call.1} parent=23 // pred_fallthru
          _
        // Predicated region
        $region33: #{tpu_custom_call.1} parent=23 // pred_check
          %p257 = pneg %p129
        $region34: #{tpu_custom_call.1} parent=23 // pred_check_branch
          %259 = sbr.rel (%p257) target = $region36
        $region35: #{tpu_custom_call.1} parent=23 // pred_region
          %s260 = sand.u32 %s119, 1
          %s261 = scalar_lea.sflag [#allocation10], %s260
          %s262 = sand.u32 %s119, 1
          %s263 = smul.addr %s262, 128
          %s264 = scalar_lea.vmem [#allocation9], %s263
          %s265 = smul.u32 16, %s27
          %s267 = ssub.s32 2048, 2048
          %268 = vsyncadd %s261, %s267
          %s269 = smul.addr %s265, 128
          %s270 = scalar_lea.hbm %s3, %s269
          %s271 = sshll.u32 %s264, 4
          %s272 = int_to_ptr.vmem [resolvable:$true] %s271
          %277 = dma.hbm_to_vmem [thread:$0]  %s270, 2048, %s272, %s261, 128, 128, 8
        $region36: #{tpu_custom_call.1} parent=23 // pred_fallthru
          _
      $region24: #{tpu_custom_call.1} parent=5 // pred_fallthru
        _
      %p278 = scmp.le.s32.totalorder 1, %s19
      %p279 = scmp.lt.s32.totalorder %s19, 5
      %p280 = pnand %p278, %p279
      %p281 = pneg %p280
      // Predicated region
      $region37: #{tpu_custom_call.1} parent=5 // pred_check
        _
      $region38: #{tpu_custom_call.1} parent=5 // pred_check_branch
        %283 = sbr.rel (%p280) target = $region40
      $region39: #{tpu_custom_call.1} parent=5 // pred_region
        %s284 = ssub.s32 %s19, 1
        // Predicated region
        $region41: #{tpu_custom_call.1} parent=39 // pred_check
          %p285 = pneg %p57
        $region42: #{tpu_custom_call.1} parent=39 // pred_check_branch
          %287 = sbr.rel (%p285) target = $region44
        $region43: #{tpu_custom_call.1} parent=39 // pred_region
          %288 = dma.done [#allocation4], 256
        $region44: #{tpu_custom_call.1} parent=39 // pred_fallthru
          _
        %s289 = sand.u32 %s24, 1
        %s290 = scalar_lea.sflag [#allocation7], %s289
        %s291 = sand.u32 %s70, 1
        %s292 = smul.addr %s291, 128
        %s293 = scalar_lea.vmem [#allocation6], %s292
        // Predicated region
        $region45: #{tpu_custom_call.1} parent=39 // pred_check
          %p294 = pneg %p83
        $region46: #{tpu_custom_call.1} parent=39 // pred_check_branch
          %296 = sbr.rel (%p294) target = $region48
        $region47: #{tpu_custom_call.1} parent=39 // pred_region
          %297 = dma.done %s290, 2048
        $region48: #{tpu_custom_call.1} parent=39 // pred_fallthru
          _
        %s298 = sand.u32 %s24, 1
        %s299 = scalar_lea.sflag [#allocation7], %s298
        %s300 = sand.u32 %s96, 1
        %s301 = scalar_lea.vmem [#allocation8], %s300
        // Predicated region
        $region49: #{tpu_custom_call.1} parent=39 // pred_check
          %p302 = pneg %p109
        $region50: #{tpu_custom_call.1} parent=39 // pred_check_branch
          %304 = sbr.rel (%p302) target = $region52
        $region51: #{tpu_custom_call.1} parent=39 // pred_region
          %305 = dma.done %s299, 16
        $region52: #{tpu_custom_call.1} parent=39 // pred_fallthru
          _
        %s306 = sand.u32 %s122, 1
        %s307 = scalar_lea.sflag [#allocation10], %s306
        %s308 = sand.u32 %s122, 1
        %s309 = smul.addr %s308, 128
        %s310 = scalar_lea.vmem [#allocation9], %s309
        // Predicated region
        $region53: #{tpu_custom_call.1} parent=39 // pred_check
          %p311 = pneg %p135
        $region54: #{tpu_custom_call.1} parent=39 // pred_check_branch
          %313 = sbr.rel (%p311) target = $region56
        $region55: #{tpu_custom_call.1} parent=39 // pred_region
          %314 = dma.done %s307, 2048
        $region56: #{tpu_custom_call.1} parent=39 // pred_fallthru
          _
        %p315 = pneg %p57
        %p316 = pneg %p54
        %s317 = sand.u32 %s24, 1
        %s318 = scalar_lea.sflag [#allocation7], %s317
        %s319 = sand.u32 %s70, 1
        %s320 = smul.addr %s319, 128
        %s321 = scalar_lea.vmem [#allocation6], %s320
        %p322 = pneg %p83
        %p323 = pneg %p80
        %s324 = sand.u32 %s24, 1
        %s325 = scalar_lea.sflag [#allocation7], %s324
        %s326 = sand.u32 %s96, 1
        %s327 = scalar_lea.vmem [#allocation8], %s326
        %p328 = pneg %p109
        %p329 = pneg %p106
        %s330 = sand.u32 %s122, 1
        %s331 = scalar_lea.sflag [#allocation10], %s330
        %s332 = sand.u32 %s122, 1
        %s333 = smul.addr %s332, 128
        %s334 = scalar_lea.vmem [#allocation9], %s333
        %p335 = pneg %p135
        %p336 = pneg %p132
        %p337 = pneg %p156
        %p338 = pneg %p153
        %p339 = pneg %p182
        %p340 = pneg %p179
        %s341 = smul.u32 2, %s28
        %s342 = smul.u32 16, %s29
        %s343 = smul.u32 2, %s28
        %v344 = vld [vmem:[#allocation3] sm:$0xff]
        %v345 = vld [vmem:[#allocation3 + $0x8] sm:$0xff]
        %v346 = vld [vmem:[%s293] sm:$0xff]
        %v347 = vld [vmem:[%s293 + $0x8] sm:$0xff]
        %v348 = vld [vmem:[%s293 + $0x10] sm:$0xff]
        %v349 = vld [vmem:[%s293 + $0x18] sm:$0xff]
        %v350 = vld [vmem:[%s293 + $0x20] sm:$0xff]
        %v351 = vld [vmem:[%s293 + $0x28] sm:$0xff]
        %v352 = vld [vmem:[%s293 + $0x30] sm:$0xff]
        %v353 = vld [vmem:[%s293 + $0x38] sm:$0xff]
        %v354 = vld [vmem:[%s293 + $0x40] sm:$0xff]
        %v355 = vld [vmem:[%s293 + $0x48] sm:$0xff]
        %v356 = vld [vmem:[%s293 + $0x50] sm:$0xff]
        %v357 = vld [vmem:[%s293 + $0x58] sm:$0xff]
        %v358 = vld [vmem:[%s293 + $0x60] sm:$0xff]
        %v359 = vld [vmem:[%s293 + $0x68] sm:$0xff]
        %v360 = vld [vmem:[%s293 + $0x70] sm:$0xff]
        %v361 = vld [vmem:[%s293 + $0x78] sm:$0xff]
        %v362 = vld [vmem:[%s301] sm:$0x1]
        %v364 = vlaneseq
        %v365 = vshrl.u32 %v364, 7
        %v366 = vsub.s32 0, %v365
        %v367 = vrot.slane %v362, %v366
        %369 = vmatprep.subr.mxu0 0.0
        %370 = vmatpush1.msra.mxu0 %v361
        %371 = vmatprep.subr.mxu0 0.0
        %372 = vmatpush1.msra.mxu0 %v360
        %373 = vmatprep.subr.mxu0 0.0
        %374 = vmatpush1.msra.mxu0 %v359
        %375 = vmatprep.subr.mxu0 0.0
        %376 = vmatpush1.msra.mxu0 %v358
        %377 = vmatprep.subr.mxu0 0.0
        %378 = vmatpush1.msra.mxu0 %v357
        %379 = vmatprep.subr.mxu0 0.0
        %380 = vmatpush1.msra.mxu0 %v356
        %381 = vmatprep.subr.mxu0 0.0
        %382 = vmatpush1.msra.mxu0 %v355
        %383 = vmatprep.subr.mxu0 0.0
        %384 = vmatpush1.msra.mxu0 %v354
        %385 = vmatprep.subr.mxu0 0.0
        %386 = vmatpush1.msra.mxu0 %v353
        %387 = vmatprep.subr.mxu0 0.0
        %388 = vmatpush1.msra.mxu0 %v352
        %389 = vmatprep.subr.mxu0 0.0
        %390 = vmatpush1.msra.mxu0 %v351
        %391 = vmatprep.subr.mxu0 0.0
        %392 = vmatpush1.msra.mxu0 %v350
        %393 = vmatprep.subr.mxu0 0.0
        %394 = vmatpush1.msra.mxu0 %v349
        %395 = vmatprep.subr.mxu0 0.0
        %396 = vmatpush1.msra.mxu0 %v348
        %397 = vmatprep.subr.mxu0 0.0
        %398 = vmatpush1.msra.mxu0 %v347
        %399 = vmatprep.subr.mxu0 0.0
        %400 = vmatpush1.msra.mxu0 %v346
        %401 = vmatprep.subr.mxu0 0.0
        %402 = vmatpush2.msra.mxu0 0.0
        %403 = vmatprep.subr.mxu0 0.0
        %404 = vmatpush2.msra.mxu0 0.0
        %405 = vmatprep.subr.mxu0 0.0
        %406 = vmatpush2.msra.mxu0 0.0
        %407 = vmatprep.subr.mxu0 0.0
        %408 = vmatpush2.msra.mxu0 0.0
        %409 = vmatprep.subr.mxu0 0.0
        %410 = vmatpush2.msra.mxu0 0.0
        %411 = vmatprep.subr.mxu0 0.0
        %412 = vmatpush2.msra.mxu0 0.0
        %413 = vmatprep.subr.mxu0 0.0
        %414 = vmatpush2.msra.mxu0 0.0
        %415 = vmatprep.subr.mxu0 0.0
        %416 = vmatpush2.msra.mxu0 0.0
        %417 = vmatprep.subr.mxu0 0.0
        %418 = vmatpush2.msra.mxu0 0.0
        %419 = vmatprep.subr.mxu0 0.0
        %420 = vmatpush2.msra.mxu0 0.0
        %421 = vmatprep.subr.mxu0 0.0
        %422 = vmatpush2.msra.mxu0 0.0
        %423 = vmatprep.subr.mxu0 0.0
        %424 = vmatpush2.msra.mxu0 0.0
        %425 = vmatprep.subr.mxu0 0.0
        %426 = vmatpush2.msra.mxu0 0.0
        %427 = vmatprep.subr.mxu0 0.0
        %428 = vmatpush2.msra.mxu0 0.0
        %429 = vmatprep.subr.mxu0 0.0
        %430 = vmatpush2.msra.mxu0 0.0
        %431 = vmatprep.subr.mxu0 0.0
        %432 = vmatpush2.msra.mxu0 0.0
        %433 = vmatprep.mubr.f32.mxu0 0.0
        %434 = vmatmul.mubr.f32.gmra.mxu0 %v344
        %v435 = vpop.f32.mrf.mxu0
        %v436 = vadd.f32 %v367, %v435
        %v437 = vpop.f32.mrf.mxu0
        %438 = vmatprep.mubr.f32.mxu0 0.0
        %439 = vmatmul.mubr.f32.gmra.mxu0 %v345
        %v440 = vpop.f32.mrf.mxu0
        %v441 = vadd.f32 %v367, %v440
        %v442 = vpop.f32.mrf.mxu0
        %443 = vdwg.mxu0
        %v444 = vmax.f32 %v436, 0.0
        %v445 = vmax.f32 %v441, 0.0
        %v446 = vld [vmem:[%s310] sm:$0xff]
        %v447 = vld [vmem:[%s310 + $0x8] sm:$0xff]
        %v448 = vld [vmem:[%s310 + $0x10] sm:$0xff]
        %v449 = vld [vmem:[%s310 + $0x18] sm:$0xff]
        %v450 = vld [vmem:[%s310 + $0x20] sm:$0xff]
        %v451 = vld [vmem:[%s310 + $0x28] sm:$0xff]
        %v452 = vld [vmem:[%s310 + $0x30] sm:$0xff]
        %v453 = vld [vmem:[%s310 + $0x38] sm:$0xff]
        %v454 = vld [vmem:[%s310 + $0x40] sm:$0xff]
        %v455 = vld [vmem:[%s310 + $0x48] sm:$0xff]
        %v456 = vld [vmem:[%s310 + $0x50] sm:$0xff]
        %v457 = vld [vmem:[%s310 + $0x58] sm:$0xff]
        %v458 = vld [vmem:[%s310 + $0x60] sm:$0xff]
        %v459 = vld [vmem:[%s310 + $0x68] sm:$0xff]
        %v460 = vld [vmem:[%s310 + $0x70] sm:$0xff]
        %v461 = vld [vmem:[%s310 + $0x78] sm:$0xff]
        %462 = vmatprep.subr.mxu0 0.0
        %463 = vmatpush1.msra.mxu0 %v461
        %464 = vmatprep.subr.mxu0 0.0
        %465 = vmatpush1.msra.mxu0 %v460
        %466 = vmatprep.subr.mxu0 0.0
        %467 = vmatpush1.msra.mxu0 %v459
        %468 = vmatprep.subr.mxu0 0.0
        %469 = vmatpush1.msra.mxu0 %v458
        %470 = vmatprep.subr.mxu0 0.0
        %471 = vmatpush1.msra.mxu0 %v457
        %472 = vmatprep.subr.mxu0 0.0
        %473 = vmatpush1.msra.mxu0 %v456
        %474 = vmatprep.subr.mxu0 0.0
        %475 = vmatpush1.msra.mxu0 %v455
        %476 = vmatprep.subr.mxu0 0.0
        %477 = vmatpush1.msra.mxu0 %v454
        %478 = vmatprep.subr.mxu0 0.0
        %479 = vmatpush1.msra.mxu0 %v453
        %480 = vmatprep.subr.mxu0 0.0
        %481 = vmatpush1.msra.mxu0 %v452
        %482 = vmatprep.subr.mxu0 0.0
        %483 = vmatpush1.msra.mxu0 %v451
        %484 = vmatprep.subr.mxu0 0.0
        %485 = vmatpush1.msra.mxu0 %v450
        %486 = vmatprep.subr.mxu0 0.0
        %487 = vmatpush1.msra.mxu0 %v449
        %488 = vmatprep.subr.mxu0 0.0
        %489 = vmatpush1.msra.mxu0 %v448
        %490 = vmatprep.subr.mxu0 0.0
        %491 = vmatpush1.msra.mxu0 %v447
        %492 = vmatprep.subr.mxu0 0.0
        %493 = vmatpush1.msra.mxu0 %v446
        %494 = vmatprep.subr.mxu0 0.0
        %495 = vmatpush2.msra.mxu0 0.0
        %496 = vmatprep.subr.mxu0 0.0
        %497 = vmatpush2.msra.mxu0 0.0
        %498 = vmatprep.subr.mxu0 0.0
        %499 = vmatpush2.msra.mxu0 0.0
        %500 = vmatprep.subr.mxu0 0.0
        %501 = vmatpush2.msra.mxu0 0.0
        %502 = vmatprep.subr.mxu0 0.0
        %503 = vmatpush2.msra.mxu0 0.0
        %504 = vmatprep.subr.mxu0 0.0
        %505 = vmatpush2.msra.mxu0 0.0
        %506 = vmatprep.subr.mxu0 0.0
        %507 = vmatpush2.msra.mxu0 0.0
        %508 = vmatprep.subr.mxu0 0.0
        %509 = vmatpush2.msra.mxu0 0.0
        %510 = vmatprep.subr.mxu0 0.0
        %511 = vmatpush2.msra.mxu0 0.0
        %512 = vmatprep.subr.mxu0 0.0
        %513 = vmatpush2.msra.mxu0 0.0
        %514 = vmatprep.subr.mxu0 0.0
        %515 = vmatpush2.msra.mxu0 0.0
        %516 = vmatprep.subr.mxu0 0.0
        %517 = vmatpush2.msra.mxu0 0.0
        %518 = vmatprep.subr.mxu0 0.0
        %519 = vmatpush2.msra.mxu0 0.0
        %520 = vmatprep.subr.mxu0 0.0
        %521 = vmatpush2.msra.mxu0 0.0
        %522 = vmatprep.subr.mxu0 0.0
        %523 = vmatpush2.msra.mxu0 0.0
        %524 = vmatprep.subr.mxu0 0.0
        %525 = vmatpush2.msra.mxu0 0.0
        %526 = vmatprep.mubr.f32.mxu0 0.0
        %527 = vmatmul.mubr.f32.gmra.mxu0 %v444
        %v528 = vpop.f32.mrf.mxu0
        %v529 = vadd.f32 0.0, %v528
        %v530 = vpop.f32.mrf.mxu0
        %531 = vmatprep.mubr.f32.mxu0 0.0
        %532 = vmatmul.mubr.f32.gmra.mxu0 %v445
        %v533 = vpop.f32.mrf.mxu0
        %v534 = vadd.f32 0.0, %v533
        %v535 = vpop.f32.mrf.mxu0
        %536 = vdwg.mxu0
        %p537 = scmp.eq.s32.totalorder %s29, 0
        // Predicated region
        $region57: #{tpu_custom_call.1} parent=39 // pred_check
          %p538 = pneg %p537
        $region58: #{tpu_custom_call.1} parent=39 // pred_check_branch
          %540 = sbr.rel (%p538) target = $region60
        $region59: #{tpu_custom_call.1} parent=39 // pred_region
          %541 = vst [vmem:[#allocation2] sm:$0xff] %v529
          %542 = vst [vmem:[#allocation2 + $0x8] sm:$0xff] %v534
        $region60: #{tpu_custom_call.1} parent=39 // pred_fallthru
          _
        %p543 = scmp.gt.s32.totalorder %s29, 0
        // Predicated region
        $region61: #{tpu_custom_call.1} parent=39 // pred_check
          %p544 = pneg %p543
        $region62: #{tpu_custom_call.1} parent=39 // pred_check_branch
          %546 = sbr.rel (%p544) target = $region64
        $region63: #{tpu_custom_call.1} parent=39 // pred_region
          %v547 = vld [vmem:[#allocation2] sm:$0xff]
          %v548 = vld [vmem:[#allocation2 + $0x8] sm:$0xff]
          %v549 = vadd.f32 %v547, %v529
          %v550 = vadd.f32 %v548, %v534
          %551 = vst [vmem:[#allocation2] sm:$0xff] %v549
          %552 = vst [vmem:[#allocation2 + $0x8] sm:$0xff] %v550
        $region64: #{tpu_custom_call.1} parent=39 // pred_fallthru
          _
        %p553 = scmp.eq.s32.totalorder %s29, 3
        // Predicated region
        $region65: #{tpu_custom_call.1} parent=39 // pred_check
          %p554 = pneg %p553
        $region66: #{tpu_custom_call.1} parent=39 // pred_check_branch
          %556 = sbr.rel (%p554) target = $region68
        $region67: #{tpu_custom_call.1} parent=39 // pred_region
          %v557 = vld [vmem:[#allocation2] sm:$0xff]
          %v558 = vld [vmem:[#allocation2 + $0x8] sm:$0xff]
          %v559 = vld [vmem:[%s4] sm:$0x1]
          %v561 = vlaneseq
          %v562 = vshrl.u32 %v561, 7
          %v563 = vsub.s32 0, %v562
          %v564 = vrot.slane %v559, %v563
          %v566 = vadd.f32 %v557, %v564
          %v567 = vadd.f32 %v558, %v564
          %568 = vst [vmem:[#allocation11] sm:$0xff] %v566
          %569 = vst [vmem:[#allocation11 + $0x8] sm:$0xff] %v567
        $region68: #{tpu_custom_call.1} parent=39 // pred_fallthru
          _
        // Predicated region
        $region69: #{tpu_custom_call.1} parent=39 // pred_check
          %p570 = pneg %p179
        $region70: #{tpu_custom_call.1} parent=39 // pred_check_branch
          %572 = sbr.rel (%p570) target = $region72
        $region71: #{tpu_custom_call.1} parent=39 // pred_region
          %s573 = smul.u32 2, %s28
          %s575 = ssub.s32 256, 256
          %576 = vsyncadd [#allocation5], %s575
          %s577 = smul.addr %s573, 128
          %s578 = scalar_lea.hbm %s5, %s577
          %s579 = sshll.u32 [#allocation11], 4
          %s580 = int_to_ptr.vmem [resolvable:$true] %s579
          %585 = dma.vmem_to_hbm [thread:$0]  %s580, 256, %s578, [#allocation5], 128, 128, 8
        $region72: #{tpu_custom_call.1} parent=39 // pred_fallthru
          _
        // Predicated region
        $region73: #{tpu_custom_call.1} parent=39 // pred_check
          %p586 = pneg %p179
        $region74: #{tpu_custom_call.1} parent=39 // pred_check_branch
          %588 = sbr.rel (%p586) target = $region76
        $region75: #{tpu_custom_call.1} parent=39 // pred_region
          %589 = dma.done [#allocation5], 256
        $region76: #{tpu_custom_call.1} parent=39 // pred_fallthru
          _
      $region40: #{tpu_custom_call.1} parent=5 // pred_fallthru
        _
      %p590 = scmp.le.s32.totalorder 2, %s19
      // Predicated region
      $region77: #{tpu_custom_call.1} parent=5 // pred_check
        %p591 = pneg %p590
      $region78: #{tpu_custom_call.1} parent=5 // pred_check_branch
        %593 = sbr.rel (%p591) target = $region80
      $region79: #{tpu_custom_call.1} parent=5 // pred_region
        %s594 = ssub.s32 %s19, 2
      $region80: #{tpu_custom_call.1} parent=5 // pred_fallthru
        _
    $region6: #{tpu_custom_call.1} parent=1 // loop_footer
      %s23 = sadd.s32 1, %s19
    $region7: #{tpu_custom_call.1} parent=1 // loop_footer_branch
      %18 = sbr.rel target = $region3
    $region8: #{tpu_custom_call.1} parent=1 // loop_exit
      _
    %595 = vsyncpa [#allocation4], 1
    %s596 = scalar_lea.sflag [#allocation4], 1
    %597 = vsyncpa %s596, 1
    %598 = vsyncpa [#allocation7], 1
    %s599 = scalar_lea.sflag [#allocation7], 1
    %600 = vsyncpa %s599, 1
    %601 = vsyncpa [#allocation10], 1
    %s602 = scalar_lea.sflag [#allocation10], 1
    %603 = vsyncpa %s602, 1
    %604 = vsyncpa [#allocation5], 1
    %s605 = scalar_lea.sflag [#allocation5], 1
    %606 = vsyncpa %s605, 1

</llo_original>
